<compile_context>
chip_gen: v5e
topology: v5e:2x2
jax: 0.10.0
libtpu: 0.0.40
codegen_flags: <defaults>
</compile_context>

<pallas_src>
import functools

import jax
import jax.numpy as jnp
from jax.experimental import pallas as pl
from jax.experimental.pallas import tpu as pltpu


def _round_up(x, m):
    return ((x + m - 1) // m) * m


def _pad_gate_mat(w, h, hp, d_in, d_in_p):
    """(4h, d_in) -> (4hp, d_in_p), preserving PyTorch gate order [i, f, g, o]."""
    w4 = w.reshape(4, h, d_in)
    w4 = jnp.pad(w4, ((0, 0), (0, hp - h), (0, d_in_p - d_in)))
    return w4.reshape(4 * hp, d_in_p)


def _pad_gate_vec(b, h, hp):
    b4 = b.reshape(4, h)
    return jnp.pad(b4, ((0, 0), (0, hp - h))).reshape(4 * hp)


# -----------------------------------------------------------------------------
# Pallas kernel: LSTM recurrence over one (batch-tile, time-chunk) block.
# grid = (num_batch_tiles [parallel], num_time_chunks [arbitrary/serial])
# -----------------------------------------------------------------------------
def lstm_chunk_kernel(xg_ref, whh_ref, len_ref, y_ref, hN_ref, cN_ref):
    tc = xg_ref.shape[0]          # timesteps in this chunk
    Hp = hN_ref.shape[-1]         # padded hidden size (multiple of 128)
    t_chunk = pl.program_id(1)

    # h/c live in the resident output blocks (constant index across time axis).
    @pl.when(t_chunk == 0)
    def _():
        hN_ref[...] = jnp.zeros_like(hN_ref)
        cN_ref[...] = jnp.zeros_like(cN_ref)

    w_hh = whh_ref[...]           # (Hp, 4Hp) bf16, invariant -> hoisted
    lens = len_ref[...]           # (bt, 1) int32
    t0 = t_chunk * tc

    def step(i, carry):
        h, c = carry              # f32 (bt, Hp)
        # Only the serial half of the work: recurrent matmul (bf16 in, f32 acc).
        gates = xg_ref[i] + jnp.dot(h.astype(jnp.bfloat16), w_hh,
                                    preferred_element_type=jnp.float32)
        # Hp is a multiple of 128 -> each gate slice is lane-tile aligned.
        i_g = jax.nn.sigmoid(gates[:, 0 * Hp:1 * Hp])
        f_g = jax.nn.sigmoid(gates[:, 1 * Hp:2 * Hp])
        g_g = jnp.tanh(gates[:, 2 * Hp:3 * Hp])
        o_g = jax.nn.sigmoid(gates[:, 3 * Hp:4 * Hp])

        c_new = f_g * c + i_g * g_g
        h_new = o_g * jnp.tanh(c_new)

        # Packed-sequence semantics: freeze state past each length, zero output.
        valid = (t0 + i) < lens                       # (bt, 1) bool
        h_next = jnp.where(valid, h_new, h)
        c_next = jnp.where(valid, c_new, c)
        y_ref[i] = jnp.where(valid, h_new, 0.0)
        return (h_next, c_next)

    h_fin, c_fin = jax.lax.fori_loop(0, tc, step, (hN_ref[...], cN_ref[...]))
    hN_ref[...] = h_fin
    cN_ref[...] = c_fin


def lstm_layer_pallas(xg, whh_t_bf16, lengths2d, *, tc, bt):
    """xg: (Tp, Bp, 4Hp) f32 precomputed input gates (+bias), time-major.
       whh_t_bf16: (Hp, 4Hp) bf16.  lengths2d: (Bp, 1) int32.
       Returns y (Tp, Bp, Hp) f32, h_final (Bp, Hp), c_final (Bp, Hp)."""
    Tp, Bp, G = xg.shape
    Hp = G // 4
    grid = (Bp // bt, Tp // tc)

    # Raise the scoped VMEM limit only when the estimated working set needs it
    # (v6e: 32 MiB default of 128 MiB physical).  Double-buffered x/y blocks,
    # weight counted twice, plus resident h/c and slack.
    est = 2 * (tc * bt * G * 4 + tc * bt * Hp * 4 + Hp * G * 2) \
        + 4 * bt * Hp * 4 + (1 << 20)
    cp_kwargs = dict(dimension_semantics=("parallel", "arbitrary"))
    if est > 32 * 1024 * 1024:
        cp_kwargs["vmem_limit_bytes"] = min(int(est * 1.25), 100 * 1024 * 1024)

    grid_spec = pltpu.PrefetchScalarGridSpec(
        num_scalar_prefetch=0,
        grid=grid,
        in_specs=[
            pl.BlockSpec((tc, bt, G), lambda b, t: (t, b, 0)),   # xg chunk
            # Invariant weight: constant index_map -> DMA'd once, stays resident.
            # TODO(synk): on v7x (64 MiB VMEM) single-buffer it (pl.Buffered(1)).
            pl.BlockSpec((Hp, G), lambda b, t: (0, 0)),
            pl.BlockSpec((bt, 1), lambda b, t: (b, 0)),          # lengths
        ],
        out_specs=[
            pl.BlockSpec((tc, bt, Hp), lambda b, t: (t, b, 0)),  # outputs chunk
            pl.BlockSpec((bt, Hp), lambda b, t: (b, 0)),         # final hidden
            pl.BlockSpec((bt, Hp), lambda b, t: (b, 0)),         # final cell
        ],
    )

    out_shapes = (
        jax.ShapeDtypeStruct((Tp, Bp, Hp), jnp.float32),
        jax.ShapeDtypeStruct((Bp, Hp), jnp.float32),
        jax.ShapeDtypeStruct((Bp, Hp), jnp.float32),
    )

    return pl.pallas_call(
        lstm_chunk_kernel,
        out_shape=out_shapes,
        grid_spec=grid_spec,
        compiler_params=pltpu.CompilerParams(**cp_kwargs),
    )(xg, whh_t_bf16, lengths2d)


# -----------------------------------------------------------------------------
# Encoder forward (embedding gather + hoisted input projection + Pallas LSTM)
# -----------------------------------------------------------------------------
def encoder_forward(params, src, src_mask, *, num_layers, max_len=None,
                    time_chunk=32, batch_tile=64):
    emb = jnp.take(params["embedding"], src, axis=0)          # (B, T, E) gather (glue)
    lengths = src_mask.sum(axis=1).astype(jnp.int32)          # (B,)
    B, T, E = emb.shape

    # TPU-friendly padding: B -> multiple of 8 sublanes (tiled across cores when
    # large), T -> multiple of the time chunk, H -> multiple of 128 lanes.
    bt = min(_round_up(B, 8), batch_tile)
    Bp = _round_up(B, bt)
    tc = min(T, time_chunk)
    Tp = _round_up(T, tc)
    H = params["w_hh_0"].shape[1]
    Hp = _round_up(H, 128)

    x = jnp.transpose(emb, (1, 0, 2)).astype(jnp.float32)     # (T, B, E) time-major
    x = jnp.pad(x, ((0, Tp - T), (0, Bp - B), (0, 0)))        # (Tp, Bp, E)
    lengths_p = jnp.pad(lengths, (0, Bp - B)).reshape(Bp, 1)  # pad rows -> len 0

    hiddens, cells = [], []
    for layer in range(num_layers):
        wih = params[f"w_ih_{layer}"]                          # (4H, d_in_raw)
        whh = params[f"w_hh_{layer}"]                          # (4H, H)
        bias = params[f"b_ih_{layer}"] + params[f"b_hh_{layer}"]
        d_in_raw = wih.shape[1]
        d_in_p = x.shape[-1]

        wih_p = _pad_gate_mat(wih, H, Hp, d_in_raw, d_in_p)    # (4Hp, d_in_p)
        whh_p = _pad_gate_mat(whh, H, Hp, H, Hp)               # (4Hp, Hp)
        bias_p = _pad_gate_vec(bias, H, Hp)                    # (4Hp,)

        # Hoisted input projection: one large, fully parallel bf16 matmul over
        # ALL timesteps (fills the MXU), bias folded in, f32 accumulation.
        xg = jnp.einsum(
            "tbe,eg->tbg",
            x.astype(jnp.bfloat16), wih_p.T.astype(jnp.bfloat16),
            preferred_element_type=jnp.float32) + bias_p[None, None, :]

        y, h_f, c_f = lstm_layer_pallas(
            xg, whh_p.T.astype(jnp.bfloat16), lengths_p, tc=tc, bt=bt)
        x = y                                                  # (Tp, Bp, Hp), pad lanes stay 0
        hiddens.append(h_f[:B, :H])
        cells.append(c_f[:B, :H])

    outputs = jnp.transpose(x, (1, 0, 2))[:B, :T, :H]          # (B, T, H)
    if max_len is not None:
        # pad_packed truncation to max(lengths): static slice, no host sync.
        outputs = outputs[:, :max_len, :]
    hidden = jnp.stack(hiddens, axis=0)                        # (num_layers, B, H)
    cell = jnp.stack(cells, axis=0)
    return outputs, hidden, cell, lengths


# -----------------------------------------------------------------------------
# Pure-JAX reference (same bf16-matmul / f32-state precision choices)
# -----------------------------------------------------------------------------
def ref_encoder_forward(params, src, src_mask, num_layers, max_len=None):
    emb = jnp.take(params["embedding"], src, axis=0)
    lengths = src_mask.sum(axis=1).astype(jnp.int32)
    B, T, _ = emb.shape
    x = jnp.transpose(emb, (1, 0, 2)).astype(jnp.float32)
    hiddens, cells = [], []
    for layer in range(num_layers):
        wih = params[f"w_ih_{layer}"]
        whh = params[f"w_hh_{layer}"]
        bias = params[f"b_ih_{layer}"] + params[f"b_hh_{layer}"]
        H = whh.shape[1]
        xg = jnp.einsum("tbe,eg->tbg", x.astype(jnp.bfloat16),
                        wih.T.astype(jnp.bfloat16),
                        preferred_element_type=jnp.float32) + bias[None, None, :]
        whh_t = whh.T.astype(jnp.bfloat16)

        def step(carry, inp):
            h, c = carry
            g_t, t = inp
            gates = g_t + jnp.dot(h.astype(jnp.bfloat16), whh_t,
                                  preferred_element_type=jnp.float32)
            i = jax.nn.sigmoid(gates[:, :H])
            f = jax.nn.sigmoid(gates[:, H:2 * H])
            g = jnp.tanh(gates[:, 2 * H:3 * H])
            o = jax.nn.sigmoid(gates[:, 3 * H:])
            c_new = f * c + i * g
            h_new = o * jnp.tanh(c_new)
            m = (t < lengths)[:, None]
            return ((jnp.where(m, h_new, h), jnp.where(m, c_new, c)),
                    jnp.where(m, h_new, 0.0))

        init = (jnp.zeros((B, H), jnp.float32), jnp.zeros((B, H), jnp.float32))
        (h_f, c_f), ys = jax.lax.scan(step, init, (xg, jnp.arange(T)))
        x = ys
        hiddens.append(h_f)
        cells.append(c_f)
    outputs = jnp.transpose(x, (1, 0, 2))
    if max_len is not None:
        outputs = outputs[:, :max_len, :]
    return outputs, jnp.stack(hiddens), jnp.stack(cells), lengths


# -----------------------------------------------------------------------------
# Deterministic parameter init + driver
# -----------------------------------------------------------------------------
def init_params(key, vocab_size, embedding_dim, hidden_dim, num_layers):
    params = {}
    k_emb, key = jax.random.split(key)
    params["embedding"] = jax.random.normal(
        k_emb, (vocab_size, embedding_dim), jnp.float32)
    scale = 1.0 / jnp.sqrt(hidden_dim)
    for layer in range(num_layers):
        d_in = embedding_dim if layer == 0 else hidden_dim
        k1, k2, k3, k4, key = jax.random.split(key, 5)
        params[f"w_ih_{layer}"] = jax.random.uniform(
            k1, (4 * hidden_dim, d_in), jnp.float32, -scale, scale)
        params[f"w_hh_{layer}"] = jax.random.uniform(
            k2, (4 * hidden_dim, hidden_dim), jnp.float32, -scale, scale)
        params[f"b_ih_{layer}"] = jax.random.uniform(
            k3, (4 * hidden_dim,), jnp.float32, -scale, scale)
        params[f"b_hh_{layer}"] = jax.random.uniform(
            k4, (4 * hidden_dim,), jnp.float32, -scale, scale)
    return params


if __name__ == "__main__":
    vocab_size, embedding_dim, hidden_dim, num_layers = 20, 16, 32, 2
    B, T = 2, 8

    key = jax.random.PRNGKey(0)
    k_params, k_src = jax.random.split(key)
    params = init_params(k_params, vocab_size, embedding_dim, hidden_dim, num_layers)

    src = jax.random.randint(k_src, (B, T), 0, vocab_size, dtype=jnp.int32)
    lengths_list = [8, 5]
    lengths_in = jnp.array(lengths_list, dtype=jnp.int32)
    src_mask = (jnp.arange(T)[None, :] < lengths_in[:, None]).astype(jnp.int32)
    max_len = max(lengths_list)   # static, known at the call site (no device sync)

    fwd = jax.jit(functools.partial(
        encoder_forward, num_layers=num_layers, max_len=max_len))
    outputs, hidden, cell, lengths = fwd(params, src, src_mask)
    jax.block_until_ready((outputs, hidden, cell, lengths))

    # correctness check vs pure-JAX reference
    r_out, r_hid, r_cell, r_len = ref_encoder_forward(
        params, src, src_mask, num_layers, max_len=max_len)
    assert outputs.shape == r_out.shape == (B, max_len, hidden_dim)
    assert hidden.shape == (num_layers, B, hidden_dim)
    assert cell.shape == (num_layers, B, hidden_dim)
    assert jnp.allclose(outputs, r_out, atol=5e-3, rtol=5e-3), \
        float(jnp.max(jnp.abs(outputs - r_out)))
    assert jnp.allclose(hidden, r_hid, atol=5e-3, rtol=5e-3)
    assert jnp.allclose(cell, r_cell, atol=5e-3, rtol=5e-3)
    assert jnp.array_equal(lengths, r_len)
    # packed-sequence semantics: padded positions are exactly zero
    tmask = (jnp.arange(max_len)[None, :] < lengths[:, None])[..., None]
    assert jnp.all(jnp.where(tmask, 0.0, outputs) == 0.0)

    print("KERNEL_OK")
</pallas_src>

<mosaic_0001>
module attributes {stable_mosaic.version = 11 : i64} {
  func.func @lstm_chunk_kernel(%arg0: i32, %arg1: i32, %arg2: memref<8x8x512xf32, #tpu.memory_space<vmem>>, %arg3: memref<128x512xbf16, #tpu.memory_space<vmem>>, %arg4: memref<8x1xi32, #tpu.memory_space<vmem>>, %arg5: memref<8x8x128xf32, #tpu.memory_space<vmem>>, %arg6: memref<8x128xf32, #tpu.memory_space<vmem>>, %arg7: memref<8x128xf32, #tpu.memory_space<vmem>>) attributes {dimension_semantics = [#tpu.dimension_semantics<parallel>, #tpu.dimension_semantics<arbitrary>], iteration_bounds = array<i64: 1, 1>, scalar_prefetch = 0 : i64, scratch_operands = 0 : i64, tpu.core_type = #tpu.core_type<tc>, window_params = [{transform_indices = @transform_0, window_bounds = array<i64: 8, 8, 512>}, {pipeline_mode = #tpu.pipeline_mode<synchronous>, transform_indices = @transform_1, window_bounds = array<i64: 128, 512>}, {transform_indices = @transform_2, window_bounds = array<i64: 8, 1>}, {transform_indices = @transform_3, window_bounds = array<i64: 8, 8, 128>}, {transform_indices = @transform_4, window_bounds = array<i64: 8, 128>}, {transform_indices = @transform_5, window_bounds = array<i64: 8, 128>}]} {
    %c0_i32 = arith.constant 0 : i32
    %0 = arith.cmpi eq, %arg1, %c0_i32 : i32
    %1 = arith.extui %0 : i1 to i32
    %c0_i32_0 = arith.constant 0 : i32
    %2 = arith.cmpi ne, %1, %c0_i32_0 : i32
    scf.if %2 {
      %cst = arith.constant 0.000000e+00 : f32
      %12 = vector.broadcast %cst : f32 to vector<8x128xf32>
      %c0_15 = arith.constant 0 : index
      %c0_16 = arith.constant 0 : index
      %13 = vector.load %arg6[%c0_15, %c0_16] : memref<8x128xf32, #tpu.memory_space<vmem>>, vector<8x128xf32>
      tpu.vector_store %arg6[%c0_15, %c0_16], %12 {strides = array<i32>} : memref<8x128xf32, #tpu.memory_space<vmem>>, vector<8x128xf32>,
      %cst_17 = arith.constant 0.000000e+00 : f32
      %14 = vector.broadcast %cst_17 : f32 to vector<8x128xf32>
      %c0_18 = arith.constant 0 : index
      %c0_19 = arith.constant 0 : index
      %15 = vector.load %arg7[%c0_18, %c0_19] : memref<8x128xf32, #tpu.memory_space<vmem>>, vector<8x128xf32>
      tpu.vector_store %arg7[%c0_18, %c0_19], %14 {strides = array<i32>} : memref<8x128xf32, #tpu.memory_space<vmem>>, vector<8x128xf32>,
    } else {
    }
    %c0 = arith.constant 0 : index
    %c0_1 = arith.constant 0 : index
    %3 = vector.load %arg3[%c0, %c0_1] : memref<128x512xbf16, #tpu.memory_space<vmem>>, vector<128x512xbf16>
    %c0_2 = arith.constant 0 : index
    %c0_3 = arith.constant 0 : index
    %4 = vector.load %arg4[%c0_2, %c0_3] : memref<8x1xi32, #tpu.memory_space<vmem>>, vector<8x1xi32>
    %c8_i32 = arith.constant 8 : i32
    %5 = arith.muli %arg1, %c8_i32 : i32
    %c0_4 = arith.constant 0 : index
    %c0_5 = arith.constant 0 : index
    %6 = vector.load %arg6[%c0_4, %c0_5] : memref<8x128xf32, #tpu.memory_space<vmem>>, vector<8x128xf32>
    %c0_6 = arith.constant 0 : index
    %c0_7 = arith.constant 0 : index
    %7 = vector.load %arg7[%c0_6, %c0_7] : memref<8x128xf32, #tpu.memory_space<vmem>>, vector<8x128xf32>
    %c0_i32_8 = arith.constant 0 : i32
    %c8_i32_9 = arith.constant 8 : i32
    %8 = arith.addi %c0_i32_8, %c8_i32_9 : i32
    %c1_i32 = arith.constant 1 : i32
    %9:2 = scf.for %arg8 = %c0_i32_8 to %8 step %c1_i32 iter_args(%arg9 = %6, %arg10 = %7) -> (vector<8x128xf32>, vector<8x128xf32>)  : i32 {
      %12 = arith.index_cast %arg8 : i32 to index
      %c0_15 = arith.constant 0 : index
      %c0_16 = arith.constant 0 : index
      %13 = vector.load %arg2[%12, %c0_15, %c0_16] : memref<8x8x512xf32, #tpu.memory_space<vmem>>, vector<1x8x512xf32>
      %14 = vector.shape_cast %13 : vector<1x8x512xf32> to vector<8x512xf32>
      %15 = arith.truncf %arg9 : vector<8x128xf32> to vector<8x128xbf16>
      %cst = arith.constant dense<0.000000e+00> : vector<8x512xf32>
      %16 = tpu.matmul %15, %3, %cst {dimension_numbers = #tpu.dot_dimension_numbers<[1], [0], [0], [1], [0, 0, 1, 1], [], []>} : vector<8x128xbf16>, vector<128x512xbf16>, vector<8x512xf32> -> vector<8x512xf32>
      %17 = arith.addf %14, %16 : vector<8x512xf32>
      %18 = vector.extract_strided_slice %17 {offsets = [0, 0], sizes = [8, 128], strides = [1, 1]} : vector<8x512xf32> to vector<8x128xf32>
      %19 = arith.negf %18 : vector<8x128xf32>
      %20 = math.exp %19 : vector<8x128xf32>
      %cst_17 = arith.constant 1.000000e+00 : f32
      %21 = vector.broadcast %cst_17 : f32 to vector<8x128xf32>
      %22 = arith.addf %21, %20 : vector<8x128xf32>
      %23 = arith.divf %21, %22 : vector<8x128xf32>
      %24 = vector.extract_strided_slice %17 {offsets = [0, 128], sizes = [8, 128], strides = [1, 1]} : vector<8x512xf32> to vector<8x128xf32>
      %25 = arith.negf %24 : vector<8x128xf32>
      %26 = math.exp %25 : vector<8x128xf32>
      %cst_18 = arith.constant 1.000000e+00 : f32
      %27 = vector.broadcast %cst_18 : f32 to vector<8x128xf32>
      %28 = arith.addf %27, %26 : vector<8x128xf32>
      %29 = arith.divf %27, %28 : vector<8x128xf32>
      %30 = vector.extract_strided_slice %17 {offsets = [0, 256], sizes = [8, 128], strides = [1, 1]} : vector<8x512xf32> to vector<8x128xf32>
      %31 = math.tanh %30 : vector<8x128xf32>
      %32 = vector.extract_strided_slice %17 {offsets = [0, 384], sizes = [8, 128], strides = [1, 1]} : vector<8x512xf32> to vector<8x128xf32>
      %33 = arith.negf %32 : vector<8x128xf32>
      %34 = math.exp %33 : vector<8x128xf32>
      %cst_19 = arith.constant 1.000000e+00 : f32
      %35 = vector.broadcast %cst_19 : f32 to vector<8x128xf32>
      %36 = arith.addf %35, %34 : vector<8x128xf32>
      %37 = arith.divf %35, %36 : vector<8x128xf32>
      %38 = arith.mulf %29, %arg10 : vector<8x128xf32>
      %39 = arith.mulf %23, %31 : vector<8x128xf32>
      %40 = arith.addf %38, %39 : vector<8x128xf32>
      %41 = math.tanh %40 : vector<8x128xf32>
      %42 = arith.mulf %37, %41 : vector<8x128xf32>
      %43 = arith.addi %5, %arg8 : i32
      %44 = vector.broadcast %43 : i32 to vector<8x1xi32>
      %45 = arith.cmpi slt, %44, %4 : vector<8x1xi32>
      %46 = vector.shape_cast %45 : vector<8x1xi1> to vector<8x1xi1>
      %47 = vector.broadcast %46 : vector<8x1xi1> to vector<8x128xi1>
      %48 = arith.select %47, %42, %arg9 : vector<8x128xi1>, vector<8x128xf32>
      %49 = vector.shape_cast %45 : vector<8x1xi1> to vector<8x1xi1>
      %50 = vector.broadcast %49 : vector<8x1xi1> to vector<8x128xi1>
      %51 = arith.select %50, %40, %arg10 : vector<8x128xi1>, vector<8x128xf32>
      %cst_20 = arith.constant 0.000000e+00 : f32
      %52 = vector.shape_cast %45 : vector<8x1xi1> to vector<8x1xi1>
      %53 = vector.broadcast %52 : vector<8x1xi1> to vector<8x128xi1>
      %54 = vector.broadcast %cst_20 : f32 to vector<8x128xf32>
      %55 = arith.select %53, %42, %54 : vector<8x128xi1>, vector<8x128xf32>
      %56 = arith.index_cast %arg8 : i32 to index
      %c0_21 = arith.constant 0 : index
      %c0_22 = arith.constant 0 : index
      %57 = vector.load %arg5[%56, %c0_21, %c0_22] : memref<8x8x128xf32, #tpu.memory_space<vmem>>, vector<1x8x128xf32>
      %58 = vector.shape_cast %57 : vector<1x8x128xf32> to vector<8x128xf32>
      %59 = vector.shape_cast %55 : vector<8x128xf32> to vector<1x8x128xf32>
      tpu.vector_store %arg5[%56, %c0_21, %c0_22], %59 {strides = array<i32>} : memref<8x8x128xf32, #tpu.memory_space<vmem>>, vector<1x8x128xf32>,
      scf.yield %48, %51 : vector<8x128xf32>, vector<8x128xf32>
    }
    %c8_i32_10 = arith.constant 8 : i32
    %c0_11 = arith.constant 0 : index
    %c0_12 = arith.constant 0 : index
    %10 = vector.load %arg6[%c0_11, %c0_12] : memref<8x128xf32, #tpu.memory_space<vmem>>, vector<8x128xf32>
    tpu.vector_store %arg6[%c0_11, %c0_12], %9#0 {strides = array<i32>} : memref<8x128xf32, #tpu.memory_space<vmem>>, vector<8x128xf32>,
    %c0_13 = arith.constant 0 : index
    %c0_14 = arith.constant 0 : index
    %11 = vector.load %arg7[%c0_13, %c0_14] : memref<8x128xf32, #tpu.memory_space<vmem>>, vector<8x128xf32>
    tpu.vector_store %arg7[%c0_13, %c0_14], %9#1 {strides = array<i32>} : memref<8x128xf32, #tpu.memory_space<vmem>>, vector<8x128xf32>,
    return
  }
  func.func @transform_0(%arg0: i32, %arg1: i32) -> (i32, i32, i32) {
    %c0_i32 = arith.constant 0 : i32
    %c0_i32_0 = arith.constant 0 : i32
    return %arg1, %arg0, %c0_i32 : i32, i32, i32
  }
  func.func @transform_1(%arg0: i32, %arg1: i32) -> (i32, i32) {
    %c0_i32 = arith.constant 0 : i32
    %c0_i32_0 = arith.constant 0 : i32
    %c0_i32_1 = arith.constant 0 : i32
    return %c0_i32, %c0_i32_0 : i32, i32
  }
  func.func @transform_2(%arg0: i32, %arg1: i32) -> (i32, i32) {
    %c0_i32 = arith.constant 0 : i32
    %c0_i32_0 = arith.constant 0 : i32
    return %arg0, %c0_i32 : i32, i32
  }
  func.func @transform_3(%arg0: i32, %arg1: i32) -> (i32, i32, i32) {
    %c0_i32 = arith.constant 0 : i32
    %c0_i32_0 = arith.constant 0 : i32
    return %arg1, %arg0, %c0_i32 : i32, i32, i32
  }
  func.func @transform_4(%arg0: i32, %arg1: i32) -> (i32, i32) {
    %c0_i32 = arith.constant 0 : i32
    %c0_i32_0 = arith.constant 0 : i32
    return %arg0, %c0_i32 : i32, i32
  }
  func.func @transform_5(%arg0: i32, %arg1: i32) -> (i32, i32) {
    %c0_i32 = arith.constant 0 : i32
    %c0_i32_0 = arith.constant 0 : i32
    return %arg0, %c0_i32 : i32, i32
  }
}

</mosaic_0001>

<llo_original>
// kernel: encoder_forward.2
$region0: #{encoder_forward.2}
  #allocation0 [shape = 'u32[]', space=smem, size = 0x4, offset = 0x4, fixed_abs, tag = 'smem constant byte address 0x4 - core index']
  #allocation1 [shape = 'u32[72,128]{1,0:T(1,128)}', space=vmem, size = 0x9000, scoped, tag = 'internal scratch']
  %s0 = inlined_call_operand.vmem [shape: f32[8,8,512], index: 0, kind: input, shape index: {}]
  %s1 = inlined_call_operand.vmem [shape: bf16[128,512], index: 1, kind: input, shape index: {}]
  %s2 = inlined_call_operand.vmem [shape: s32[8,1], index: 2, kind: input, shape index: {}]
  %s3 = inlined_call_operand.vmem [shape: f32[8,8,128], index: 3, kind: output, shape index: {0}]
  %s4 = inlined_call_operand.vmem [shape: f32[8,128], index: 4, kind: output, shape index: {1}]
  %s5 = inlined_call_operand.vmem [shape: f32[8,128], index: 5, kind: output, shape index: {2}]
  %6 = xla_tuple %s3, %s4, %s5
  %s7 = sld [smem:[#allocation0]]
  $region49: #{encoder_forward.2} parent=0
    _
  %s9 = ssub.s32 1, %s7
  %s10 = scalar_select 0, %s9, %s7
  // Predicated region
  $region2: #{encoder_forward.2} parent=0 // pred_check
    _
  $region3: #{encoder_forward.2} parent=0 // pred_check_branch
    %12 = sbr.rel (0) target = $region5
  $region4: #{encoder_forward.2} parent=0 // pred_region
    _
  $region5: #{encoder_forward.2} parent=0 // pred_fallthru
    _
  // Predicated region
  $region6: #{encoder_forward.2} parent=0 // pred_check
    _
  $region7: #{encoder_forward.2} parent=0 // pred_check_branch
    %14 = sbr.rel (0) target = $region9
  $region8: #{encoder_forward.2} parent=0 // pred_region
    _
  $region9: #{encoder_forward.2} parent=0 // pred_fallthru
    _
  // Predicated region
  $region10: #{encoder_forward.2} parent=0 // pred_check
    _
  $region11: #{encoder_forward.2} parent=0 // pred_check_branch
    %16 = sbr.rel (0) target = $region13
  $region12: #{encoder_forward.2} parent=0 // pred_region
    _
  $region13: #{encoder_forward.2} parent=0 // pred_fallthru
    _
  %p17 = scmp.eq.s32.totalorder 0, 0
  // Predicated region
  $region14: #{encoder_forward.2} parent=0 // pred_check
    %p18 = pneg %p17
  $region15: #{encoder_forward.2} parent=0 // pred_check_branch
    %20 = sbr.rel (%p18) target = $region17
  $region16: #{encoder_forward.2} parent=0 // pred_region
    %21 = vst [vmem:[%s4] sm:$0xff] 0.0
    %22 = vst [vmem:[%s5] sm:$0xff] 0.0
  $region17: #{encoder_forward.2} parent=0 // pred_fallthru
    _
  %v23 = vld [vmem:[%s1] sm:$0xff]
  %v24 = vld [vmem:[%s1 + $0x8] sm:$0xff]
  %v25 = vld [vmem:[%s1 + $0x10] sm:$0xff]
  %v26 = vld [vmem:[%s1 + $0x18] sm:$0xff]
  %v27 = vld [vmem:[%s1 + $0x20] sm:$0xff]
  %v28 = vld [vmem:[%s1 + $0x28] sm:$0xff]
  %v29 = vld [vmem:[%s1 + $0x30] sm:$0xff]
  %v30 = vld [vmem:[%s1 + $0x38] sm:$0xff]
  %v31 = vld [vmem:[%s1 + $0x40] sm:$0xff]
  %v32 = vld [vmem:[%s1 + $0x48] sm:$0xff]
  %v33 = vld [vmem:[%s1 + $0x50] sm:$0xff]
  %v34 = vld [vmem:[%s1 + $0x58] sm:$0xff]
  %v35 = vld [vmem:[%s1 + $0x60] sm:$0xff]
  %v36 = vld [vmem:[%s1 + $0x68] sm:$0xff]
  %v37 = vld [vmem:[%s1 + $0x70] sm:$0xff]
  %v38 = vld [vmem:[%s1 + $0x78] sm:$0xff]
  %v39 = vld [vmem:[%s1 + $0x80] sm:$0xff]
  %v40 = vld [vmem:[%s1 + $0x88] sm:$0xff]
  %v41 = vld [vmem:[%s1 + $0x90] sm:$0xff]
  %v42 = vld [vmem:[%s1 + $0x98] sm:$0xff]
  %v43 = vld [vmem:[%s1 + $0xa0] sm:$0xff]
  %v44 = vld [vmem:[%s1 + $0xa8] sm:$0xff]
  %v45 = vld [vmem:[%s1 + $0xb0] sm:$0xff]
  %v46 = vld [vmem:[%s1 + $0xb8] sm:$0xff]
  %v47 = vld [vmem:[%s1 + $0xc0] sm:$0xff]
  %v48 = vld [vmem:[%s1 + $0xc8] sm:$0xff]
  %v49 = vld [vmem:[%s1 + $0xd0] sm:$0xff]
  %v50 = vld [vmem:[%s1 + $0xd8] sm:$0xff]
  %v51 = vld [vmem:[%s1 + $0xe0] sm:$0xff]
  %v52 = vld [vmem:[%s1 + $0xe8] sm:$0xff]
  %v53 = vld [vmem:[%s1 + $0xf0] sm:$0xff]
  %v54 = vld [vmem:[%s1 + $0xf8] sm:$0xff]
  %v55 = vld [vmem:[%s2] sm:$0xff]
  %s56 = smul.u32 0, 8
  %v57 = vld [vmem:[%s4] sm:$0xff]
  %v58 = vld [vmem:[%s5] sm:$0xff]
  loop: start=0, step=1, limit=8
  $region18: #{encoder_forward.2} parent=0 // loop_pre_header
    _
  $region19: #{encoder_forward.2} parent=0 // loop_header
    %s60 = sphi 0, %s64
    %p61 = scmp.ge.s32.totalorder %s60, 8
    %v65 = vphi %v57, %v362
    %v66 = vphi %v58, %v363
  $region20: #{encoder_forward.2} parent=0 // loop_header_branch
    %63 = sbr.rel (%p61) target = $region24
  $region21: #{encoder_forward.2} parent=0 // loop_body
    %s67 = smul.u32 %s60, 4
    %s68 = smul.addr %s67, 8
    %s69 = scalar_lea.vmem %s0, %s68
    %v70 = vld [vmem:[%s69] sm:$0xff]
    %v71 = vld [vmem:[%s69 + $0x8] sm:$0xff]
    %v72 = vld [vmem:[%s69 + $0x10] sm:$0xff]
    %v73 = vld [vmem:[%s69 + $0x18] sm:$0xff]
    %v74 = vpack.c.bf16 %v65, %v65
    %v107 = vunpack.c.l.b16 %v23
    %v108 = vunpack.c.h.b16 %v23
    %v109 = vunpack.c.l.b16 %v24
    %v110 = vunpack.c.h.b16 %v24
    %v111 = vunpack.c.l.b16 %v25
    %v112 = vunpack.c.h.b16 %v25
    %v113 = vunpack.c.l.b16 %v26
    %v114 = vunpack.c.h.b16 %v26
    %v115 = vunpack.c.l.b16 %v27
    %v116 = vunpack.c.h.b16 %v27
    %v117 = vunpack.c.l.b16 %v28
    %v118 = vunpack.c.h.b16 %v28
    %v119 = vunpack.c.l.b16 %v29
    %v120 = vunpack.c.h.b16 %v29
    %v121 = vunpack.c.l.b16 %v30
    %v122 = vunpack.c.h.b16 %v30
    %v123 = vunpack.c.l.b16 %v31
    %v124 = vunpack.c.h.b16 %v31
    %v125 = vunpack.c.l.b16 %v32
    %v126 = vunpack.c.h.b16 %v32
    %v127 = vunpack.c.l.b16 %v33
    %v128 = vunpack.c.h.b16 %v33
    %v129 = vunpack.c.l.b16 %v34
    %v130 = vunpack.c.h.b16 %v34
    %v131 = vunpack.c.l.b16 %v35
    %v132 = vunpack.c.h.b16 %v35
    %v133 = vunpack.c.l.b16 %v36
    %v134 = vunpack.c.h.b16 %v36
    %v135 = vunpack.c.l.b16 %v37
    %v136 = vunpack.c.h.b16 %v37
    %v137 = vunpack.c.l.b16 %v38
    %v138 = vunpack.c.h.b16 %v38
    %v139 = vunpack.c.l.b16 %v39
    %v140 = vunpack.c.h.b16 %v39
    %v141 = vunpack.c.l.b16 %v40
    %v142 = vunpack.c.h.b16 %v40
    %v143 = vunpack.c.l.b16 %v41
    %v144 = vunpack.c.h.b16 %v41
    %v145 = vunpack.c.l.b16 %v42
    %v146 = vunpack.c.h.b16 %v42
    %v147 = vunpack.c.l.b16 %v43
    %v148 = vunpack.c.h.b16 %v43
    %v149 = vunpack.c.l.b16 %v44
    %v150 = vunpack.c.h.b16 %v44
    %v151 = vunpack.c.l.b16 %v45
    %v152 = vunpack.c.h.b16 %v45
    %v153 = vunpack.c.l.b16 %v46
    %v154 = vunpack.c.h.b16 %v46
    %v155 = vunpack.c.l.b16 %v47
    %v156 = vunpack.c.h.b16 %v47
    %v157 = vunpack.c.l.b16 %v48
    %v158 = vunpack.c.h.b16 %v48
    %v159 = vunpack.c.l.b16 %v49
    %v160 = vunpack.c.h.b16 %v49
    %v161 = vunpack.c.l.b16 %v50
    %v162 = vunpack.c.h.b16 %v50
    %v163 = vunpack.c.l.b16 %v51
    %v164 = vunpack.c.h.b16 %v51
    %v165 = vunpack.c.l.b16 %v52
    %v166 = vunpack.c.h.b16 %v52
    %v167 = vunpack.c.l.b16 %v53
    %v168 = vunpack.c.h.b16 %v53
    %v169 = vunpack.c.l.b16 %v54
    %v170 = vunpack.c.h.b16 %v54
    %v171 = vpack.c.b16 %v111, %v107
    %v172 = vpack.c.b16 %v112, %v108
    %v173 = vpack.c.b16 %v113, %v109
    %v174 = vpack.c.b16 %v114, %v110
    %v175 = vpack.c.b16 %v119, %v115
    %v176 = vpack.c.b16 %v120, %v116
    %v177 = vpack.c.b16 %v121, %v117
    %v178 = vpack.c.b16 %v122, %v118
    %v179 = vpack.c.b16 %v127, %v123
    %v180 = vpack.c.b16 %v128, %v124
    %v181 = vpack.c.b16 %v129, %v125
    %v182 = vpack.c.b16 %v130, %v126
    %v183 = vpack.c.b16 %v135, %v131
    %v184 = vpack.c.b16 %v136, %v132
    %v185 = vpack.c.b16 %v137, %v133
    %v186 = vpack.c.b16 %v138, %v134
    %v187 = vpack.c.b16 %v143, %v139
    %v188 = vpack.c.b16 %v144, %v140
    %v189 = vpack.c.b16 %v145, %v141
    %v190 = vpack.c.b16 %v146, %v142
    %v191 = vpack.c.b16 %v151, %v147
    %v192 = vpack.c.b16 %v152, %v148
    %v193 = vpack.c.b16 %v153, %v149
    %v194 = vpack.c.b16 %v154, %v150
    %v195 = vpack.c.b16 %v159, %v155
    %v196 = vpack.c.b16 %v160, %v156
    %v197 = vpack.c.b16 %v161, %v157
    %v198 = vpack.c.b16 %v162, %v158
    %v199 = vpack.c.b16 %v167, %v163
    %v200 = vpack.c.b16 %v168, %v164
    %v201 = vpack.c.b16 %v169, %v165
    %v202 = vpack.c.b16 %v170, %v166
    %235 = vmatpush.bf16.msra.mxu0 %v199
    %236 = vmatpush.bf16.msra.mxu0 %v195
    %237 = vmatpush.bf16.msra.mxu0 %v191
    %238 = vmatpush.bf16.msra.mxu0 %v187
    %239 = vmatpush.bf16.msra.mxu0 %v183
    %240 = vmatpush.bf16.msra.mxu0 %v179
    %241 = vmatpush.bf16.msra.mxu0 %v175
    %242 = vmatpush.bf16.msra.mxu0 %v171
    %243 = vmatmul.bf16.gmra.mxu0 %v74
    %v244 = vpop.f32.mrf.mxu0
    %v245 = vadd.f32 0.0, %v244
    %v246 = vpop.f32.mrf.mxu0
    %247 = vdwg.mxu0
    %248 = vmatpush.bf16.msra.mxu0 %v200
    %249 = vmatpush.bf16.msra.mxu0 %v196
    %250 = vmatpush.bf16.msra.mxu0 %v192
    %251 = vmatpush.bf16.msra.mxu0 %v188
    %252 = vmatpush.bf16.msra.mxu0 %v184
    %253 = vmatpush.bf16.msra.mxu0 %v180
    %254 = vmatpush.bf16.msra.mxu0 %v176
    %255 = vmatpush.bf16.msra.mxu0 %v172
    %256 = vmatmul.bf16.gmra.mxu0 %v74
    %v257 = vpop.f32.mrf.mxu0
    %v258 = vadd.f32 0.0, %v257
    %v259 = vpop.f32.mrf.mxu0
    %260 = vdwg.mxu0
    %261 = vmatpush.bf16.msra.mxu0 %v201
    %262 = vmatpush.bf16.msra.mxu0 %v197
    %263 = vmatpush.bf16.msra.mxu0 %v193
    %264 = vmatpush.bf16.msra.mxu0 %v189
    %265 = vmatpush.bf16.msra.mxu0 %v185
    %266 = vmatpush.bf16.msra.mxu0 %v181
    %267 = vmatpush.bf16.msra.mxu0 %v177
    %268 = vmatpush.bf16.msra.mxu0 %v173
    %269 = vmatmul.bf16.gmra.mxu0 %v74
    %v270 = vpop.f32.mrf.mxu0
    %v271 = vadd.f32 0.0, %v270
    %v272 = vpop.f32.mrf.mxu0
    %273 = vdwg.mxu0
    %274 = vmatpush.bf16.msra.mxu0 %v202
    %275 = vmatpush.bf16.msra.mxu0 %v198
    %276 = vmatpush.bf16.msra.mxu0 %v194
    %277 = vmatpush.bf16.msra.mxu0 %v190
    %278 = vmatpush.bf16.msra.mxu0 %v186
    %279 = vmatpush.bf16.msra.mxu0 %v182
    %280 = vmatpush.bf16.msra.mxu0 %v178
    %281 = vmatpush.bf16.msra.mxu0 %v174
    %282 = vmatmul.bf16.gmra.mxu0 %v74
    %v283 = vpop.f32.mrf.mxu0
    %v284 = vadd.f32 0.0, %v283
    %v285 = vpop.f32.mrf.mxu0
    %286 = vdwg.mxu0
    %v287 = vadd.f32 %v70, %v245
    %v288 = vadd.f32 %v71, %v258
    %v289 = vadd.f32 %v72, %v271
    %v290 = vadd.f32 %v73, %v284
    %v291 = vxor.u32 %v287, 2147483648
    %v292 = vmul.f32 %v291, 1.442695
    %v293 = vpow.pop %v292
    %v294 = vadd.f32 %v293, 1.0
    %v295 = vrcp.pop %v294
    %v296 = vmul.f32 %v294, %v295
    %v297 = vsub.f32 1.0, %v296
    %v298 = vmul.f32 %v295, %v297
    %v299 = vadd.f32 %v295, %v298
    %vm300 = vweird.f32 %v294
    %vm301 = vweird.f32 %v295
    %vm302 = vmor %vm300, %vm301
    %v303 = vsel %vm302, %v295, %v299
    %v304 = vand.u32 2147483647, %v294
    %vm305 = vcmp.eq.f32.partialorder %v304, 8.507059e+37
    %v306 = vand.u32 %v294, 2147483648
    %v307 = vor.u32 1.1754944e-38, %v306
    %v308 = vsel %vm305, %v307, %v303
    %v309 = vmul.f32 1.0, %v308
    %v310 = vxor.u32 %v288, 2147483648
    %v311 = vmul.f32 %v310, 1.442695
    %v312 = vpow.pop %v311
    %v313 = vadd.f32 %v312, 1.0
    %v314 = vrcp.pop %v313
    %v315 = vmul.f32 %v313, %v314
    %v316 = vsub.f32 1.0, %v315
    %v317 = vmul.f32 %v314, %v316
    %v318 = vadd.f32 %v314, %v317
    %vm319 = vweird.f32 %v313
    %vm320 = vweird.f32 %v314
    %vm321 = vmor %vm319, %vm320
    %v322 = vsel %vm321, %v314, %v318
    %v323 = vand.u32 2147483647, %v313
    %vm324 = vcmp.eq.f32.partialorder %v323, 8.507059e+37
    %v325 = vand.u32 %v313, 2147483648
    %v326 = vor.u32 1.1754944e-38, %v325
    %v327 = vsel %vm324, %v326, %v322
    %v328 = vmul.f32 1.0, %v327
    %v329 = vtanh.pop %v289
    %v330 = vxor.u32 %v290, 2147483648
    %v331 = vmul.f32 %v330, 1.442695
    %v332 = vpow.pop %v331
    %v333 = vadd.f32 %v332, 1.0
    %v334 = vrcp.pop %v333
    %v335 = vmul.f32 %v333, %v334
    %v336 = vsub.f32 1.0, %v335
    %v337 = vmul.f32 %v334, %v336
    %v338 = vadd.f32 %v334, %v337
    %vm339 = vweird.f32 %v333
    %vm340 = vweird.f32 %v334
    %vm341 = vmor %vm339, %vm340
    %v342 = vsel %vm341, %v334, %v338
    %v343 = vand.u32 2147483647, %v333
    %vm344 = vcmp.eq.f32.partialorder %v343, 8.507059e+37
    %v345 = vand.u32 %v333, 2147483648
    %v346 = vor.u32 1.1754944e-38, %v345
    %v347 = vsel %vm344, %v346, %v342
    %v348 = vmul.f32 1.0, %v347
    %v349 = vmul.f32 %v328, %v66
    %v350 = vmul.f32 %v309, %v329
    %v351 = vadd.f32 %v349, %v350
    %v352 = vtanh.pop %v351
    %v353 = vmul.f32 %v348, %v352
    %s354 = sadd.s32 %s56, %s60
    %v355 = vstv %s354
    %vm356 = vcmp.lt.s32.totalorder %v355, %v55
    %v357 = vsel %vm356, 1, 0
    %358 = vset.pattern.permute.xlu0 0
    %359 = vperm.xlu0 %358, %v357
    %v360 = vpop.permute.xlu0 %359
    %vm361 = vcmp.eq.s32.totalorder %v360, 1
    %v362 = vsel %vm361, %v353, %v65
    %v363 = vsel %vm361, %v351, %v66
    %v364 = vsel %vm361, %v353, 0.0
    %s365 = smul.u32 %s60, 8
    %s366 = scalar_lea.vmem %s3, %s365
    %367 = vst [vmem:[%s366] sm:$0xff] %v364
  $region22: #{encoder_forward.2} parent=0 // loop_footer
    %s64 = sadd.s32 1, %s60
  $region23: #{encoder_forward.2} parent=0 // loop_footer_branch
    %59 = sbr.rel target = $region19
  $region24: #{encoder_forward.2} parent=0 // loop_exit
    _
  %368 = vst [vmem:[%s4] sm:$0xff] %v65
  %369 = vst [vmem:[%s5] sm:$0xff] %v66
  // Predicated region
  $region25: #{encoder_forward.2} parent=0 // pred_check
    _
  $region26: #{encoder_forward.2} parent=0 // pred_check_branch
    %371 = sbr.rel (0) target = $region28
  $region27: #{encoder_forward.2} parent=0 // pred_region
    _
  $region28: #{encoder_forward.2} parent=0 // pred_fallthru
    _
  // Predicated region
  $region29: #{encoder_forward.2} parent=0 // pred_check
    _
  $region30: #{encoder_forward.2} parent=0 // pred_check_branch
    %373 = sbr.rel (0) target = $region32
  $region31: #{encoder_forward.2} parent=0 // pred_region
    _
  $region32: #{encoder_forward.2} parent=0 // pred_fallthru
    _
  // Predicated region
  $region33: #{encoder_forward.2} parent=0 // pred_check
    _
  $region34: #{encoder_forward.2} parent=0 // pred_check_branch
    %375 = sbr.rel (0) target = $region36
  $region35: #{encoder_forward.2} parent=0 // pred_region
    _
  $region36: #{encoder_forward.2} parent=0 // pred_fallthru
    _
  // Predicated region
  $region37: #{encoder_forward.2} parent=0 // pred_check
    _
  $region38: #{encoder_forward.2} parent=0 // pred_check_branch
    %377 = sbr.rel (0) target = $region40
  $region39: #{encoder_forward.2} parent=0 // pred_region
    _
  $region40: #{encoder_forward.2} parent=0 // pred_fallthru
    _
  // Predicated region
  $region41: #{encoder_forward.2} parent=0 // pred_check
    _
  $region42: #{encoder_forward.2} parent=0 // pred_check_branch
    %379 = sbr.rel (0) target = $region44
  $region43: #{encoder_forward.2} parent=0 // pred_region
    _
  $region44: #{encoder_forward.2} parent=0 // pred_fallthru
    _
  // Predicated region
  $region45: #{encoder_forward.2} parent=0 // pred_check
    _
  $region46: #{encoder_forward.2} parent=0 // pred_check_branch
    %381 = sbr.rel (0) target = $region48
  $region47: #{encoder_forward.2} parent=0 // pred_region
    _
  $region48: #{encoder_forward.2} parent=0 // pred_fallthru
    _

</llo_original>
